<compile_context>
chip_gen: v5e
topology: v5e:2x2
jax: 0.10.0
libtpu: 0.0.40
codegen_flags: <defaults>
</compile_context>

<pallas_src>
import jax
import jax.numpy as jnp
from jax import lax
from jax.experimental import pallas as pl
from jax.experimental.pallas import tpu as pltpu


def _gpgp_kernel(uc_ref, upc_ref, un_ref, upn_ref,
                 vTu_ref, vpTu_ref, vTup_ref, vpTup_ref,
                 vnu_ref, vpnu_ref, vnup_ref, vpnup_ref,
                 o_ref):
    uc = uc_ref[...]      # (tm, d)   u  / ls - mean(u /ls)
    upc = upc_ref[...]    # (tm, d)   u' / ls - mean(u'/ls)
    un = un_ref[...]      # (tm, 1)   0.5*||uc||^2
    upn = upn_ref[...]    # (tm, 1)   0.5*||upc||^2

    dn = (((1,), (0,)), ((), ()))   # (tm,d) @ (d,tn), natural MXU orientation

    def s_block(x1c, x1n, rhsT_ref, rhsn_ref):
        cross = lax.dot_general(x1c, rhsT_ref[...], dimension_numbers=dn,
                                preferred_element_type=jnp.float32)
        # -0.5 * clamp_min(sq, 0) == min(cross - 0.5||x1||^2 - 0.5||x2||^2, 0)
        return jnp.minimum(cross - x1n - rhsn_ref[...], 0.0)

    s_ac = s_block(uc, un, vTu_ref, vnu_ref)        # -0.5*sq(u , v )
    s_bd = s_block(upc, upn, vpTup_ref, vpnup_ref)  # -0.5*sq(u', v')
    s_ad = s_block(uc, un, vpTu_ref, vpnu_ref)      # -0.5*sq(u , v')
    s_bc = s_block(upc, upn, vTup_ref, vnup_ref)    # -0.5*sq(u', v )

    # K(u,v)K(u',v') - K(u,v')K(u',v), using exp(a)*exp(b) == exp(a+b).
    o_ref[...] = (jnp.exp(s_ac + s_bd) - jnp.exp(s_ad + s_bc)).astype(o_ref.dtype)


def _round_up(x, m):
    return ((x + m - 1) // m) * m


def _pad_rows(x, rows):
    pad = rows - x.shape[0]
    return jnp.pad(x, ((0, pad), (0, 0))) if pad else x


def _pad_cols(x, cols):
    pad = cols - x.shape[1]
    return jnp.pad(x, ((0, 0), (0, pad))) if pad else x


def gpgp_forward(u, u_prime, v, v_prime, ls, *, tm=None, tn=None,
                 out_dtype=jnp.float32):
    """Pallas implementation of GPGP_kernel.forward(v, v_prime)."""
    N, d = u.shape
    M, d2 = v.shape
    assert d2 == d and u_prime.shape == (N, d) and v_prime.shape == (M, d)

    f32 = jnp.float32
    inv_ls = (1.0 / ls.astype(f32)).reshape(1, d)

    # ---- O((N+M)*d) prep, hoisted into XLA glue (tiny vs. the N*M output) --
    us = u.astype(f32) * inv_ls
    ups = u_prime.astype(f32) * inv_ls
    vs = v.astype(f32) * inv_ls
    vps = v_prime.astype(f32) * inv_ls

    adj_u = jnp.mean(us, axis=0, keepdims=True)     # adjustment for x1 = u/ls
    adj_up = jnp.mean(ups, axis=0, keepdims=True)   # adjustment for x1 = u'/ls

    uc, upc = us - adj_u, ups - adj_up
    un = 0.5 * jnp.sum(uc * uc, axis=-1, keepdims=True)     # (N, 1)
    upn = 0.5 * jnp.sum(upc * upc, axis=-1, keepdims=True)  # (N, 1)

    def v_side(x, adj):
        xc = x - adj                                         # (M, d)
        xn = 0.5 * jnp.sum(xc * xc, axis=-1)[None, :]        # (1, M) lane-dense
        return xc.T, xn                                      # (d, M), (1, M)

    vTu, vnu = v_side(vs, adj_u)      # v  centered by u -side adjustment
    vpTu, vpnu = v_side(vps, adj_u)   # v' centered by u -side adjustment
    vTup, vnup = v_side(vs, adj_up)   # v  centered by u'-side adjustment
    vpTup, vpnup = v_side(vps, adj_up)  # v' centered by u'-side adjustment

    # ---- tiling: bounded tiles + zero-padding (no full-extent fallback) ----
    row_align = 16 if jnp.dtype(out_dtype).itemsize < 4 else 8
    if tm is None:
        tm = min(256, _round_up(N, row_align))
    if tn is None:
        tn = min(512, _round_up(M, 128))
    Np = _round_up(N, tm)
    Mp = _round_up(M, tn)

    uc, upc, un, upn = [_pad_rows(a, Np) for a in (uc, upc, un, upn)]
    vTu, vpTu, vTup, vpTup = [_pad_cols(a, Mp)
                              for a in (vTu, vpTu, vTup, vpTup)]
    vnu, vpnu, vnup, vpnup = [_pad_cols(a, Mp)
                              for a in (vnu, vpnu, vnup, vpnup)]

    grid = (Np // tm, Mp // tn)
    row_spec = pl.BlockSpec((tm, d), lambda i, j: (i, 0))
    rown_spec = pl.BlockSpec((tm, 1), lambda i, j: (i, 0))
    col_spec = pl.BlockSpec((d, tn), lambda i, j: (0, j))
    coln_spec = pl.BlockSpec((1, tn), lambda i, j: (0, j))

    out = pl.pallas_call(
        _gpgp_kernel,
        out_shape=jax.ShapeDtypeStruct((Np, Mp), out_dtype),
        grid_spec=pltpu.PrefetchScalarGridSpec(
            num_scalar_prefetch=0,
            grid=grid,
            in_specs=[row_spec, row_spec, rown_spec, rown_spec,
                      col_spec, col_spec, col_spec, col_spec,
                      coln_spec, coln_spec, coln_spec, coln_spec],
            out_specs=pl.BlockSpec((tm, tn), lambda i, j: (i, j)),
        ),
        compiler_params=pltpu.CompilerParams(
            dimension_semantics=("parallel", "parallel")),
    )(uc, upc, un, upn, vTu, vpTu, vTup, vpTup, vnu, vpnu, vnup, vpnup)

    if (Np, Mp) != (N, M):
        out = out[:N, :M]
    return out


def _reference_forward(u, u_prime, v, v_prime, ls):
    """Plain-JAX mirror of the PyTorch module for correctness checks."""
    def sq_dist(x1, x2):
        adj = jnp.mean(x1, axis=-2, keepdims=True)
        x1 = x1 - adj
        x2 = x2 - adj
        x1n = jnp.sum(x1 ** 2, axis=-1, keepdims=True)
        x2n = jnp.sum(x2 ** 2, axis=-1, keepdims=True)
        res = x1n - 2.0 * (x1 @ x2.T) + x2n.T
        return jnp.maximum(res, 0.0)

    def K(a, b):
        return jnp.exp(-0.5 * sq_dist(a / ls, b / ls))

    return K(u, v) * K(u_prime, v_prime) - K(u, v_prime) * K(u_prime, v)


if __name__ == "__main__":
    key = jax.random.PRNGKey(0)
    k1, k2, k3, k4, k5 = jax.random.split(key, 5)

    N, M, d = 64, 256, 8           # u/u' : (N, d)   v/v' : (M, d)
    u = jax.random.normal(k1, (N, d), dtype=jnp.float32)
    u_prime = jax.random.normal(k2, (N, d), dtype=jnp.float32)
    v = jax.random.normal(k3, (M, d), dtype=jnp.float32)
    v_prime = jax.random.normal(k4, (M, d), dtype=jnp.float32)
    ls = 0.5 + jax.random.uniform(k5, (d,), dtype=jnp.float32)

    ref = _reference_forward(u, u_prime, v, v_prime, ls)

    # 1) default tiling, f32 output.
    out = jax.block_until_ready(gpgp_forward(u, u_prime, v, v_prime, ls))
    assert out.shape == (N, M)
    assert jnp.allclose(out, ref, atol=2e-5, rtol=2e-5), \
        f"max abs err {jnp.max(jnp.abs(out - ref))}"

    # 2) explicit small tiles -> 4 x 2 grid path.
    out_t = jax.block_until_ready(
        gpgp_forward(u, u_prime, v, v_prime, ls, tm=16, tn=128))
    assert jnp.allclose(out_t, ref, atol=2e-5, rtol=2e-5), \
        f"max abs err {jnp.max(jnp.abs(out_t - ref))}"

    # 3) bf16 output (halved HBM writeback); looser tolerance.
    out_bf = jax.block_until_ready(
        gpgp_forward(u, u_prime, v, v_prime, ls, out_dtype=jnp.bfloat16))
    assert jnp.allclose(out_bf.astype(jnp.float32), ref, atol=5e-3, rtol=5e-3)

    # 4) ragged shapes -> zero-padding path.
    u2, up2 = u[:60], u_prime[:60]
    v2, vp2 = v[:200], v_prime[:200]
    ref2 = _reference_forward(u2, up2, v2, vp2, ls)
    out2 = jax.block_until_ready(gpgp_forward(u2, up2, v2, vp2, ls))
    assert out2.shape == (60, 200)
    assert jnp.allclose(out2, ref2, atol=2e-5, rtol=2e-5), \
        f"max abs err {jnp.max(jnp.abs(out2 - ref2))}"

    print("KERNEL_OK")
</pallas_src>

<mosaic_0001>
module attributes {stable_mosaic.version = 11 : i64} {
  func.func @_gpgp_kernel(%arg0: i32, %arg1: i32, %arg2: memref<64x8xf32, #tpu.memory_space<vmem>>, %arg3: memref<64x8xf32, #tpu.memory_space<vmem>>, %arg4: memref<64x1xf32, #tpu.memory_space<vmem>>, %arg5: memref<64x1xf32, #tpu.memory_space<vmem>>, %arg6: memref<8x256xf32, #tpu.memory_space<vmem>>, %arg7: memref<8x256xf32, #tpu.memory_space<vmem>>, %arg8: memref<8x256xf32, #tpu.memory_space<vmem>>, %arg9: memref<8x256xf32, #tpu.memory_space<vmem>>, %arg10: memref<1x256xf32, #tpu.memory_space<vmem>>, %arg11: memref<1x256xf32, #tpu.memory_space<vmem>>, %arg12: memref<1x256xf32, #tpu.memory_space<vmem>>, %arg13: memref<1x256xf32, #tpu.memory_space<vmem>>, %arg14: memref<64x256xf32, #tpu.memory_space<vmem>>) attributes {dimension_semantics = [#tpu.dimension_semantics<parallel>, #tpu.dimension_semantics<parallel>], iteration_bounds = array<i64: 1, 1>, scalar_prefetch = 0 : i64, scratch_operands = 0 : i64, tpu.core_type = #tpu.core_type<tc>, window_params = [{transform_indices = @transform_0, window_bounds = array<i64: 64, 8>}, {transform_indices = @transform_1, window_bounds = array<i64: 64, 8>}, {transform_indices = @transform_2, window_bounds = array<i64: 64, 1>}, {transform_indices = @transform_3, window_bounds = array<i64: 64, 1>}, {transform_indices = @transform_4, window_bounds = array<i64: 8, 256>}, {transform_indices = @transform_5, window_bounds = array<i64: 8, 256>}, {transform_indices = @transform_6, window_bounds = array<i64: 8, 256>}, {transform_indices = @transform_7, window_bounds = array<i64: 8, 256>}, {transform_indices = @transform_8, window_bounds = array<i64: 1, 256>}, {transform_indices = @transform_9, window_bounds = array<i64: 1, 256>}, {transform_indices = @transform_10, window_bounds = array<i64: 1, 256>}, {transform_indices = @transform_11, window_bounds = array<i64: 1, 256>}, {transform_indices = @transform_12, window_bounds = array<i64: 64, 256>}]} {
    %c0 = arith.constant 0 : index
    %c0_0 = arith.constant 0 : index
    %0 = vector.load %arg2[%c0, %c0_0] : memref<64x8xf32, #tpu.memory_space<vmem>>, vector<64x8xf32>
    %c0_1 = arith.constant 0 : index
    %c0_2 = arith.constant 0 : index
    %1 = vector.load %arg3[%c0_1, %c0_2] : memref<64x8xf32, #tpu.memory_space<vmem>>, vector<64x8xf32>
    %c0_3 = arith.constant 0 : index
    %c0_4 = arith.constant 0 : index
    %2 = vector.load %arg4[%c0_3, %c0_4] : memref<64x1xf32, #tpu.memory_space<vmem>>, vector<64x1xf32>
    %c0_5 = arith.constant 0 : index
    %c0_6 = arith.constant 0 : index
    %3 = vector.load %arg5[%c0_5, %c0_6] : memref<64x1xf32, #tpu.memory_space<vmem>>, vector<64x1xf32>
    %c0_7 = arith.constant 0 : index
    %c0_8 = arith.constant 0 : index
    %4 = vector.load %arg6[%c0_7, %c0_8] : memref<8x256xf32, #tpu.memory_space<vmem>>, vector<8x256xf32>
    %cst = arith.constant dense<0.000000e+00> : vector<64x256xf32>
    %5 = tpu.matmul %0, %4, %cst {dimension_numbers = #tpu.dot_dimension_numbers<[1], [0], [0], [1], [0, 0, 1, 1], [], []>} : vector<64x8xf32>, vector<8x256xf32>, vector<64x256xf32> -> vector<64x256xf32>
    %6 = vector.broadcast %2 : vector<64x1xf32> to vector<64x256xf32>
    %7 = arith.subf %5, %6 : vector<64x256xf32>
    %c0_9 = arith.constant 0 : index
    %c0_10 = arith.constant 0 : index
    %8 = vector.load %arg10[%c0_9, %c0_10] : memref<1x256xf32, #tpu.memory_space<vmem>>, vector<1x256xf32>
    %9 = vector.broadcast %8 : vector<1x256xf32> to vector<64x256xf32>
    %10 = arith.subf %7, %9 : vector<64x256xf32>
    %cst_11 = arith.constant 0.000000e+00 : f32
    %11 = vector.broadcast %cst_11 : f32 to vector<64x256xf32>
    %12 = arith.minimumf %10, %11 : vector<64x256xf32>
    %c0_12 = arith.constant 0 : index
    %c0_13 = arith.constant 0 : index
    %13 = vector.load %arg9[%c0_12, %c0_13] : memref<8x256xf32, #tpu.memory_space<vmem>>, vector<8x256xf32>
    %cst_14 = arith.constant dense<0.000000e+00> : vector<64x256xf32>
    %14 = tpu.matmul %1, %13, %cst_14 {dimension_numbers = #tpu.dot_dimension_numbers<[1], [0], [0], [1], [0, 0, 1, 1], [], []>} : vector<64x8xf32>, vector<8x256xf32>, vector<64x256xf32> -> vector<64x256xf32>
    %15 = vector.broadcast %3 : vector<64x1xf32> to vector<64x256xf32>
    %16 = arith.subf %14, %15 : vector<64x256xf32>
    %c0_15 = arith.constant 0 : index
    %c0_16 = arith.constant 0 : index
    %17 = vector.load %arg13[%c0_15, %c0_16] : memref<1x256xf32, #tpu.memory_space<vmem>>, vector<1x256xf32>
    %18 = vector.broadcast %17 : vector<1x256xf32> to vector<64x256xf32>
    %19 = arith.subf %16, %18 : vector<64x256xf32>
    %cst_17 = arith.constant 0.000000e+00 : f32
    %20 = vector.broadcast %cst_17 : f32 to vector<64x256xf32>
    %21 = arith.minimumf %19, %20 : vector<64x256xf32>
    %c0_18 = arith.constant 0 : index
    %c0_19 = arith.constant 0 : index
    %22 = vector.load %arg7[%c0_18, %c0_19] : memref<8x256xf32, #tpu.memory_space<vmem>>, vector<8x256xf32>
    %cst_20 = arith.constant dense<0.000000e+00> : vector<64x256xf32>
    %23 = tpu.matmul %0, %22, %cst_20 {dimension_numbers = #tpu.dot_dimension_numbers<[1], [0], [0], [1], [0, 0, 1, 1], [], []>} : vector<64x8xf32>, vector<8x256xf32>, vector<64x256xf32> -> vector<64x256xf32>
    %24 = vector.broadcast %2 : vector<64x1xf32> to vector<64x256xf32>
    %25 = arith.subf %23, %24 : vector<64x256xf32>
    %c0_21 = arith.constant 0 : index
    %c0_22 = arith.constant 0 : index
    %26 = vector.load %arg11[%c0_21, %c0_22] : memref<1x256xf32, #tpu.memory_space<vmem>>, vector<1x256xf32>
    %27 = vector.broadcast %26 : vector<1x256xf32> to vector<64x256xf32>
    %28 = arith.subf %25, %27 : vector<64x256xf32>
    %cst_23 = arith.constant 0.000000e+00 : f32
    %29 = vector.broadcast %cst_23 : f32 to vector<64x256xf32>
    %30 = arith.minimumf %28, %29 : vector<64x256xf32>
    %c0_24 = arith.constant 0 : index
    %c0_25 = arith.constant 0 : index
    %31 = vector.load %arg8[%c0_24, %c0_25] : memref<8x256xf32, #tpu.memory_space<vmem>>, vector<8x256xf32>
    %cst_26 = arith.constant dense<0.000000e+00> : vector<64x256xf32>
    %32 = tpu.matmul %1, %31, %cst_26 {dimension_numbers = #tpu.dot_dimension_numbers<[1], [0], [0], [1], [0, 0, 1, 1], [], []>} : vector<64x8xf32>, vector<8x256xf32>, vector<64x256xf32> -> vector<64x256xf32>
    %33 = vector.broadcast %3 : vector<64x1xf32> to vector<64x256xf32>
    %34 = arith.subf %32, %33 : vector<64x256xf32>
    %c0_27 = arith.constant 0 : index
    %c0_28 = arith.constant 0 : index
    %35 = vector.load %arg12[%c0_27, %c0_28] : memref<1x256xf32, #tpu.memory_space<vmem>>, vector<1x256xf32>
    %36 = vector.broadcast %35 : vector<1x256xf32> to vector<64x256xf32>
    %37 = arith.subf %34, %36 : vector<64x256xf32>
    %cst_29 = arith.constant 0.000000e+00 : f32
    %38 = vector.broadcast %cst_29 : f32 to vector<64x256xf32>
    %39 = arith.minimumf %37, %38 : vector<64x256xf32>
    %40 = arith.addf %12, %21 : vector<64x256xf32>
    %41 = math.exp %40 : vector<64x256xf32>
    %42 = arith.addf %30, %39 : vector<64x256xf32>
    %43 = math.exp %42 : vector<64x256xf32>
    %44 = arith.subf %41, %43 : vector<64x256xf32>
    %c0_30 = arith.constant 0 : index
    %c0_31 = arith.constant 0 : index
    %45 = vector.load %arg14[%c0_30, %c0_31] : memref<64x256xf32, #tpu.memory_space<vmem>>, vector<64x256xf32>
    tpu.vector_store %arg14[%c0_30, %c0_31], %44 {strides = array<i32>} : memref<64x256xf32, #tpu.memory_space<vmem>>, vector<64x256xf32>,
    return
  }
  func.func @transform_0(%arg0: i32, %arg1: i32) -> (i32, i32) {
    %c0_i32 = arith.constant 0 : i32
    %c0_i32_0 = arith.constant 0 : i32
    return %arg0, %c0_i32 : i32, i32
  }
  func.func @transform_1(%arg0: i32, %arg1: i32) -> (i32, i32) {
    %c0_i32 = arith.constant 0 : i32
    %c0_i32_0 = arith.constant 0 : i32
    return %arg0, %c0_i32 : i32, i32
  }
  func.func @transform_2(%arg0: i32, %arg1: i32) -> (i32, i32) {
    %c0_i32 = arith.constant 0 : i32
    %c0_i32_0 = arith.constant 0 : i32
    return %arg0, %c0_i32 : i32, i32
  }
  func.func @transform_3(%arg0: i32, %arg1: i32) -> (i32, i32) {
    %c0_i32 = arith.constant 0 : i32
    %c0_i32_0 = arith.constant 0 : i32
    return %arg0, %c0_i32 : i32, i32
  }
  func.func @transform_4(%arg0: i32, %arg1: i32) -> (i32, i32) {
    %c0_i32 = arith.constant 0 : i32
    %c0_i32_0 = arith.constant 0 : i32
    return %c0_i32, %arg1 : i32, i32
  }
  func.func @transform_5(%arg0: i32, %arg1: i32) -> (i32, i32) {
    %c0_i32 = arith.constant 0 : i32
    %c0_i32_0 = arith.constant 0 : i32
    return %c0_i32, %arg1 : i32, i32
  }
  func.func @transform_6(%arg0: i32, %arg1: i32) -> (i32, i32) {
    %c0_i32 = arith.constant 0 : i32
    %c0_i32_0 = arith.constant 0 : i32
    return %c0_i32, %arg1 : i32, i32
  }
  func.func @transform_7(%arg0: i32, %arg1: i32) -> (i32, i32) {
    %c0_i32 = arith.constant 0 : i32
    %c0_i32_0 = arith.constant 0 : i32
    return %c0_i32, %arg1 : i32, i32
  }
  func.func @transform_8(%arg0: i32, %arg1: i32) -> (i32, i32) {
    %c0_i32 = arith.constant 0 : i32
    %c0_i32_0 = arith.constant 0 : i32
    return %c0_i32, %arg1 : i32, i32
  }
  func.func @transform_9(%arg0: i32, %arg1: i32) -> (i32, i32) {
    %c0_i32 = arith.constant 0 : i32
    %c0_i32_0 = arith.constant 0 : i32
    return %c0_i32, %arg1 : i32, i32
  }
  func.func @transform_10(%arg0: i32, %arg1: i32) -> (i32, i32) {
    %c0_i32 = arith.constant 0 : i32
    %c0_i32_0 = arith.constant 0 : i32
    return %c0_i32, %arg1 : i32, i32
  }
  func.func @transform_11(%arg0: i32, %arg1: i32) -> (i32, i32) {
    %c0_i32 = arith.constant 0 : i32
    %c0_i32_0 = arith.constant 0 : i32
    return %c0_i32, %arg1 : i32, i32
  }
  func.func @transform_12(%arg0: i32, %arg1: i32) -> (i32, i32) {
    %c0_i32 = arith.constant 0 : i32
    return %arg0, %arg1 : i32, i32
  }
}

</mosaic_0001>

<llo_original>
// kernel: tpu_custom_call.1
$region0: #{tpu_custom_call.1}
  #allocation0 [shape = 'u32[]', space=smem, size = 0x4, offset = 0x4, fixed_abs, tag = 'smem constant byte address 0x4 - core index']
  #allocation1 [shape = 'u32[72,128]{1,0:T(1,128)}', space=vmem, size = 0x9000, scoped, tag = 'internal scratch']
  %s0 = inlined_call_operand.vmem [shape: f32[64,8], index: 0, kind: input, shape index: {}]
  %s1 = inlined_call_operand.vmem [shape: f32[64,8], index: 1, kind: input, shape index: {}]
  %s2 = inlined_call_operand.vmem [shape: f32[64,1], index: 2, kind: input, shape index: {}]
  %s3 = inlined_call_operand.vmem [shape: f32[64,1], index: 3, kind: input, shape index: {}]
  %s4 = inlined_call_operand.vmem [shape: f32[8,256], index: 4, kind: input, shape index: {}]
  %s5 = inlined_call_operand.vmem [shape: f32[8,256], index: 5, kind: input, shape index: {}]
  %s6 = inlined_call_operand.vmem [shape: f32[8,256], index: 6, kind: input, shape index: {}]
  %s7 = inlined_call_operand.vmem [shape: f32[8,256], index: 7, kind: input, shape index: {}]
  %s8 = inlined_call_operand.vmem [shape: f32[1,256], index: 8, kind: input, shape index: {}]
  %s9 = inlined_call_operand.vmem [shape: f32[1,256], index: 9, kind: input, shape index: {}]
  %s10 = inlined_call_operand.vmem [shape: f32[1,256], index: 10, kind: input, shape index: {}]
  %s11 = inlined_call_operand.vmem [shape: f32[1,256], index: 11, kind: input, shape index: {}]
  %s12 = inlined_call_operand.hbm [shape: f32[64,256], index: 12, kind: output, shape index: {}]
  %s13 = sld [smem:[#allocation0]]
  $region58: #{tpu_custom_call.1} parent=0
    _
  %s15 = ssub.s32 1, %s13
  %s16 = scalar_select 0, %s15, %s13
  $region1: #{tpu_custom_call.1} parent=0
    #allocation2 [shape = 'u8[65536]{0}', space=vmem, size = 0x10000, scoped, tag = 'output window, operand 0, single buffered']
    #allocation3 [shape = 's32[1]{0}', space=sflag, size = 0x4, scoped, tag = 'scoped memory for tpu_custom_call.1']
    %17 = vsyncpa [#allocation3], 0
    // Predicated region
    $region2: #{tpu_custom_call.1} parent=1 // pred_check
      _
    $region3: #{tpu_custom_call.1} parent=1 // pred_check_branch
      %19 = sbr.rel (0) target = $region5
    $region4: #{tpu_custom_call.1} parent=1 // pred_region
      _
    $region5: #{tpu_custom_call.1} parent=1 // pred_fallthru
      _
    // Predicated region
    $region6: #{tpu_custom_call.1} parent=1 // pred_check
      _
    $region7: #{tpu_custom_call.1} parent=1 // pred_check_branch
      %21 = sbr.rel (0) target = $region9
    $region8: #{tpu_custom_call.1} parent=1 // pred_region
      _
    $region9: #{tpu_custom_call.1} parent=1 // pred_fallthru
      _
    // Predicated region
    $region10: #{tpu_custom_call.1} parent=1 // pred_check
      _
    $region11: #{tpu_custom_call.1} parent=1 // pred_check_branch
      %23 = sbr.rel (0) target = $region13
    $region12: #{tpu_custom_call.1} parent=1 // pred_region
      _
    $region13: #{tpu_custom_call.1} parent=1 // pred_fallthru
      _
    // Predicated region
    $region14: #{tpu_custom_call.1} parent=1 // pred_check
      _
    $region15: #{tpu_custom_call.1} parent=1 // pred_check_branch
      %25 = sbr.rel (0) target = $region17
    $region16: #{tpu_custom_call.1} parent=1 // pred_region
      _
    $region17: #{tpu_custom_call.1} parent=1 // pred_fallthru
      _
    // Predicated region
    $region18: #{tpu_custom_call.1} parent=1 // pred_check
      _
    $region19: #{tpu_custom_call.1} parent=1 // pred_check_branch
      %27 = sbr.rel (0) target = $region21
    $region20: #{tpu_custom_call.1} parent=1 // pred_region
      _
    $region21: #{tpu_custom_call.1} parent=1 // pred_fallthru
      _
    // Predicated region
    $region22: #{tpu_custom_call.1} parent=1 // pred_check
      _
    $region23: #{tpu_custom_call.1} parent=1 // pred_check_branch
      %29 = sbr.rel (0) target = $region25
    $region24: #{tpu_custom_call.1} parent=1 // pred_region
      _
    $region25: #{tpu_custom_call.1} parent=1 // pred_fallthru
      _
    // Predicated region
    $region26: #{tpu_custom_call.1} parent=1 // pred_check
      _
    $region27: #{tpu_custom_call.1} parent=1 // pred_check_branch
      %31 = sbr.rel (0) target = $region29
    $region28: #{tpu_custom_call.1} parent=1 // pred_region
      _
    $region29: #{tpu_custom_call.1} parent=1 // pred_fallthru
      _
    // Predicated region
    $region30: #{tpu_custom_call.1} parent=1 // pred_check
      _
    $region31: #{tpu_custom_call.1} parent=1 // pred_check_branch
      %33 = sbr.rel (0) target = $region33
    $region32: #{tpu_custom_call.1} parent=1 // pred_region
      _
    $region33: #{tpu_custom_call.1} parent=1 // pred_fallthru
      _
    // Predicated region
    $region34: #{tpu_custom_call.1} parent=1 // pred_check
      _
    $region35: #{tpu_custom_call.1} parent=1 // pred_check_branch
      %35 = sbr.rel (0) target = $region37
    $region36: #{tpu_custom_call.1} parent=1 // pred_region
      _
    $region37: #{tpu_custom_call.1} parent=1 // pred_fallthru
      _
    // Predicated region
    $region38: #{tpu_custom_call.1} parent=1 // pred_check
      _
    $region39: #{tpu_custom_call.1} parent=1 // pred_check_branch
      %37 = sbr.rel (0) target = $region41
    $region40: #{tpu_custom_call.1} parent=1 // pred_region
      _
    $region41: #{tpu_custom_call.1} parent=1 // pred_fallthru
      _
    // Predicated region
    $region42: #{tpu_custom_call.1} parent=1 // pred_check
      _
    $region43: #{tpu_custom_call.1} parent=1 // pred_check_branch
      %39 = sbr.rel (0) target = $region45
    $region44: #{tpu_custom_call.1} parent=1 // pred_region
      _
    $region45: #{tpu_custom_call.1} parent=1 // pred_fallthru
      _
    // Predicated region
    $region46: #{tpu_custom_call.1} parent=1 // pred_check
      _
    $region47: #{tpu_custom_call.1} parent=1 // pred_check_branch
      %41 = sbr.rel (0) target = $region49
    $region48: #{tpu_custom_call.1} parent=1 // pred_region
      _
    $region49: #{tpu_custom_call.1} parent=1 // pred_fallthru
      _
    %v42 = vld [vmem:[%s0] sm:$0xff]
    %v43 = vld [vmem:[%s0 + $0x8] sm:$0xff]
    %v44 = vld [vmem:[%s0 + $0x10] sm:$0xff]
    %v45 = vld [vmem:[%s0 + $0x18] sm:$0xff]
    %v46 = vld [vmem:[%s0 + $0x20] sm:$0xff]
    %v47 = vld [vmem:[%s0 + $0x28] sm:$0xff]
    %v48 = vld [vmem:[%s0 + $0x30] sm:$0xff]
    %v49 = vld [vmem:[%s0 + $0x38] sm:$0xff]
    %v50 = vld [vmem:[%s1] sm:$0xff]
    %v51 = vld [vmem:[%s1 + $0x8] sm:$0xff]
    %v52 = vld [vmem:[%s1 + $0x10] sm:$0xff]
    %v53 = vld [vmem:[%s1 + $0x18] sm:$0xff]
    %v54 = vld [vmem:[%s1 + $0x20] sm:$0xff]
    %v55 = vld [vmem:[%s1 + $0x28] sm:$0xff]
    %v56 = vld [vmem:[%s1 + $0x30] sm:$0xff]
    %v57 = vld [vmem:[%s1 + $0x38] sm:$0xff]
    %v58 = vld [vmem:[%s2] sm:$0xff]
    %v59 = vld [vmem:[%s2 + $0x8] sm:$0xff]
    %v60 = vld [vmem:[%s2 + $0x10] sm:$0xff]
    %v61 = vld [vmem:[%s2 + $0x18] sm:$0xff]
    %v62 = vld [vmem:[%s2 + $0x20] sm:$0xff]
    %v63 = vld [vmem:[%s2 + $0x28] sm:$0xff]
    %v64 = vld [vmem:[%s2 + $0x30] sm:$0xff]
    %v65 = vld [vmem:[%s2 + $0x38] sm:$0xff]
    %v66 = vld [vmem:[%s3] sm:$0xff]
    %v67 = vld [vmem:[%s3 + $0x8] sm:$0xff]
    %v68 = vld [vmem:[%s3 + $0x10] sm:$0xff]
    %v69 = vld [vmem:[%s3 + $0x18] sm:$0xff]
    %v70 = vld [vmem:[%s3 + $0x20] sm:$0xff]
    %v71 = vld [vmem:[%s3 + $0x28] sm:$0xff]
    %v72 = vld [vmem:[%s3 + $0x30] sm:$0xff]
    %v73 = vld [vmem:[%s3 + $0x38] sm:$0xff]
    %v74 = vld [vmem:[%s4] sm:$0xff]
    %v75 = vld [vmem:[%s4 + $0x8] sm:$0xff]
    %vm76 = vcmask 64512
    %v78 = vsel %vm76, %v42, 0
    %v81 = vsel %vm76, %v43, 0
    %v84 = vsel %vm76, %v44, 0
    %v87 = vsel %vm76, %v45, 0
    %v90 = vsel %vm76, %v46, 0
    %v93 = vsel %vm76, %v47, 0
    %v96 = vsel %vm76, %v48, 0
    %v99 = vsel %vm76, %v49, 0
    %101 = vmatpush.msra.mxu0 0.0
    %102 = vmatpush.msra.mxu0 0.0
    %103 = vmatpush.msra.mxu0 0.0
    %104 = vmatpush.msra.mxu0 0.0
    %105 = vmatpush.msra.mxu0 0.0
    %106 = vmatpush.msra.mxu0 0.0
    %107 = vmatpush.msra.mxu0 0.0
    %108 = vmatpush.msra.mxu0 0.0
    %109 = vmatpush.msra.mxu0 0.0
    %110 = vmatpush.msra.mxu0 0.0
    %111 = vmatpush.msra.mxu0 0.0
    %112 = vmatpush.msra.mxu0 0.0
    %113 = vmatpush.msra.mxu0 0.0
    %114 = vmatpush.msra.mxu0 0.0
    %115 = vmatpush.msra.mxu0 0.0
    %116 = vmatpush.msra.mxu0 %v74
    %117 = vmatmul.f32.gmra.mxu0 %v78
    %v118 = vpop.f32.mrf.mxu0
    %v119 = vadd.f32 0.0, %v118
    %120 = vmatmul.f32.gmra.mxu0 %v81
    %v121 = vpop.f32.mrf.mxu0
    %v122 = vadd.f32 0.0, %v121
    %123 = vmatmul.f32.gmra.mxu0 %v84
    %v124 = vpop.f32.mrf.mxu0
    %v125 = vadd.f32 0.0, %v124
    %126 = vmatmul.f32.gmra.mxu0 %v87
    %v127 = vpop.f32.mrf.mxu0
    %v128 = vadd.f32 0.0, %v127
    %129 = vmatmul.f32.gmra.mxu0 %v90
    %v130 = vpop.f32.mrf.mxu0
    %v131 = vadd.f32 0.0, %v130
    %132 = vmatmul.f32.gmra.mxu0 %v93
    %v133 = vpop.f32.mrf.mxu0
    %v134 = vadd.f32 0.0, %v133
    %135 = vmatmul.f32.gmra.mxu0 %v96
    %v136 = vpop.f32.mrf.mxu0
    %v137 = vadd.f32 0.0, %v136
    %138 = vmatmul.f32.gmra.mxu0 %v99
    %v139 = vpop.f32.mrf.mxu0
    %v140 = vadd.f32 0.0, %v139
    %141 = vdwg.mxu0
    %142 = vmatpush.msra.mxu0 0.0
    %143 = vmatpush.msra.mxu0 0.0
    %144 = vmatpush.msra.mxu0 0.0
    %145 = vmatpush.msra.mxu0 0.0
    %146 = vmatpush.msra.mxu0 0.0
    %147 = vmatpush.msra.mxu0 0.0
    %148 = vmatpush.msra.mxu0 0.0
    %149 = vmatpush.msra.mxu0 0.0
    %150 = vmatpush.msra.mxu0 0.0
    %151 = vmatpush.msra.mxu0 0.0
    %152 = vmatpush.msra.mxu0 0.0
    %153 = vmatpush.msra.mxu0 0.0
    %154 = vmatpush.msra.mxu0 0.0
    %155 = vmatpush.msra.mxu0 0.0
    %156 = vmatpush.msra.mxu0 0.0
    %157 = vmatpush.msra.mxu0 %v75
    %158 = vmatmul.f32.gmra.mxu0 %v78
    %v159 = vpop.f32.mrf.mxu0
    %v160 = vadd.f32 0.0, %v159
    %161 = vmatmul.f32.gmra.mxu0 %v81
    %v162 = vpop.f32.mrf.mxu0
    %v163 = vadd.f32 0.0, %v162
    %164 = vmatmul.f32.gmra.mxu0 %v84
    %v165 = vpop.f32.mrf.mxu0
    %v166 = vadd.f32 0.0, %v165
    %167 = vmatmul.f32.gmra.mxu0 %v87
    %v168 = vpop.f32.mrf.mxu0
    %v169 = vadd.f32 0.0, %v168
    %170 = vmatmul.f32.gmra.mxu0 %v90
    %v171 = vpop.f32.mrf.mxu0
    %v172 = vadd.f32 0.0, %v171
    %173 = vmatmul.f32.gmra.mxu0 %v93
    %v174 = vpop.f32.mrf.mxu0
    %v175 = vadd.f32 0.0, %v174
    %176 = vmatmul.f32.gmra.mxu0 %v96
    %v177 = vpop.f32.mrf.mxu0
    %v178 = vadd.f32 0.0, %v177
    %179 = vmatmul.f32.gmra.mxu0 %v99
    %v180 = vpop.f32.mrf.mxu0
    %v181 = vadd.f32 0.0, %v180
    %182 = vdwg.mxu0
    %184 = vset.pattern.permute.xlu0 0
    %185 = vperm.xlu0 %184, %v58
    %v186 = vpop.permute.xlu0 %185
    %189 = vset.pattern.permute.xlu0 0
    %190 = vperm.xlu0 %189, %v59
    %v191 = vpop.permute.xlu0 %190
    %194 = vset.pattern.permute.xlu0 0
    %195 = vperm.xlu0 %194, %v60
    %v196 = vpop.permute.xlu0 %195
    %199 = vset.pattern.permute.xlu0 0
    %200 = vperm.xlu0 %199, %v61
    %v201 = vpop.permute.xlu0 %200
    %204 = vset.pattern.permute.xlu0 0
    %205 = vperm.xlu0 %204, %v62
    %v206 = vpop.permute.xlu0 %205
    %209 = vset.pattern.permute.xlu0 0
    %210 = vperm.xlu0 %209, %v63
    %v211 = vpop.permute.xlu0 %210
    %214 = vset.pattern.permute.xlu0 0
    %215 = vperm.xlu0 %214, %v64
    %v216 = vpop.permute.xlu0 %215
    %219 = vset.pattern.permute.xlu0 0
    %220 = vperm.xlu0 %219, %v65
    %v221 = vpop.permute.xlu0 %220
    %v223 = vsub.f32 %v119, %v186
    %v224 = vsub.f32 %v160, %v186
    %v225 = vsub.f32 %v122, %v191
    %v226 = vsub.f32 %v163, %v191
    %v227 = vsub.f32 %v125, %v196
    %v228 = vsub.f32 %v166, %v196
    %v229 = vsub.f32 %v128, %v201
    %v230 = vsub.f32 %v169, %v201
    %v231 = vsub.f32 %v131, %v206
    %v232 = vsub.f32 %v172, %v206
    %v233 = vsub.f32 %v134, %v211
    %v234 = vsub.f32 %v175, %v211
    %v235 = vsub.f32 %v137, %v216
    %v236 = vsub.f32 %v178, %v216
    %v237 = vsub.f32 %v140, %v221
    %v238 = vsub.f32 %v181, %v221
    %v239 = vld [vmem:[%s8] sm:$0x3]
    %v241 = vperm.slane %v239, 0
    %v242 = vperm.slane %v239, 1
    %v245 = vsub.f32 %v223, %v241
    %v246 = vsub.f32 %v224, %v242
    %v247 = vsub.f32 %v225, %v241
    %v248 = vsub.f32 %v226, %v242
    %v249 = vsub.f32 %v227, %v241
    %v250 = vsub.f32 %v228, %v242
    %v251 = vsub.f32 %v229, %v241
    %v252 = vsub.f32 %v230, %v242
    %v253 = vsub.f32 %v231, %v241
    %v254 = vsub.f32 %v232, %v242
    %v255 = vsub.f32 %v233, %v241
    %v256 = vsub.f32 %v234, %v242
    %v257 = vsub.f32 %v235, %v241
    %v258 = vsub.f32 %v236, %v242
    %v259 = vsub.f32 %v237, %v241
    %v260 = vsub.f32 %v238, %v242
    %v261 = vmin.f32 %v245, 0.0
    %v262 = vmin.f32 %v246, 0.0
    %v263 = vmin.f32 %v247, 0.0
    %v264 = vmin.f32 %v248, 0.0
    %v265 = vmin.f32 %v249, 0.0
    %v266 = vmin.f32 %v250, 0.0
    %v267 = vmin.f32 %v251, 0.0
    %v268 = vmin.f32 %v252, 0.0
    %v269 = vmin.f32 %v253, 0.0
    %v270 = vmin.f32 %v254, 0.0
    %v271 = vmin.f32 %v255, 0.0
    %v272 = vmin.f32 %v256, 0.0
    %v273 = vmin.f32 %v257, 0.0
    %v274 = vmin.f32 %v258, 0.0
    %v275 = vmin.f32 %v259, 0.0
    %v276 = vmin.f32 %v260, 0.0
    %v277 = vld [vmem:[%s7] sm:$0xff]
    %v278 = vld [vmem:[%s7 + $0x8] sm:$0xff]
    %v280 = vsel %vm76, %v50, 0
    %v283 = vsel %vm76, %v51, 0
    %v286 = vsel %vm76, %v52, 0
    %v289 = vsel %vm76, %v53, 0
    %v292 = vsel %vm76, %v54, 0
    %v295 = vsel %vm76, %v55, 0
    %v298 = vsel %vm76, %v56, 0
    %v301 = vsel %vm76, %v57, 0
    %303 = vmatpush.msra.mxu0 0.0
    %304 = vmatpush.msra.mxu0 0.0
    %305 = vmatpush.msra.mxu0 0.0
    %306 = vmatpush.msra.mxu0 0.0
    %307 = vmatpush.msra.mxu0 0.0
    %308 = vmatpush.msra.mxu0 0.0
    %309 = vmatpush.msra.mxu0 0.0
    %310 = vmatpush.msra.mxu0 0.0
    %311 = vmatpush.msra.mxu0 0.0
    %312 = vmatpush.msra.mxu0 0.0
    %313 = vmatpush.msra.mxu0 0.0
    %314 = vmatpush.msra.mxu0 0.0
    %315 = vmatpush.msra.mxu0 0.0
    %316 = vmatpush.msra.mxu0 0.0
    %317 = vmatpush.msra.mxu0 0.0
    %318 = vmatpush.msra.mxu0 %v277
    %319 = vmatmul.f32.gmra.mxu0 %v280
    %v320 = vpop.f32.mrf.mxu0
    %v321 = vadd.f32 0.0, %v320
    %322 = vmatmul.f32.gmra.mxu0 %v283
    %v323 = vpop.f32.mrf.mxu0
    %v324 = vadd.f32 0.0, %v323
    %325 = vmatmul.f32.gmra.mxu0 %v286
    %v326 = vpop.f32.mrf.mxu0
    %v327 = vadd.f32 0.0, %v326
    %328 = vmatmul.f32.gmra.mxu0 %v289
    %v329 = vpop.f32.mrf.mxu0
    %v330 = vadd.f32 0.0, %v329
    %331 = vmatmul.f32.gmra.mxu0 %v292
    %v332 = vpop.f32.mrf.mxu0
    %v333 = vadd.f32 0.0, %v332
    %334 = vmatmul.f32.gmra.mxu0 %v295
    %v335 = vpop.f32.mrf.mxu0
    %v336 = vadd.f32 0.0, %v335
    %337 = vmatmul.f32.gmra.mxu0 %v298
    %v338 = vpop.f32.mrf.mxu0
    %v339 = vadd.f32 0.0, %v338
    %340 = vmatmul.f32.gmra.mxu0 %v301
    %v341 = vpop.f32.mrf.mxu0
    %v342 = vadd.f32 0.0, %v341
    %343 = vdwg.mxu0
    %344 = vmatpush.msra.mxu0 0.0
    %345 = vmatpush.msra.mxu0 0.0
    %346 = vmatpush.msra.mxu0 0.0
    %347 = vmatpush.msra.mxu0 0.0
    %348 = vmatpush.msra.mxu0 0.0
    %349 = vmatpush.msra.mxu0 0.0
    %350 = vmatpush.msra.mxu0 0.0
    %351 = vmatpush.msra.mxu0 0.0
    %352 = vmatpush.msra.mxu0 0.0
    %353 = vmatpush.msra.mxu0 0.0
    %354 = vmatpush.msra.mxu0 0.0
    %355 = vmatpush.msra.mxu0 0.0
    %356 = vmatpush.msra.mxu0 0.0
    %357 = vmatpush.msra.mxu0 0.0
    %358 = vmatpush.msra.mxu0 0.0
    %359 = vmatpush.msra.mxu0 %v278
    %360 = vmatmul.f32.gmra.mxu0 %v280
    %v361 = vpop.f32.mrf.mxu0
    %v362 = vadd.f32 0.0, %v361
    %363 = vmatmul.f32.gmra.mxu0 %v283
    %v364 = vpop.f32.mrf.mxu0
    %v365 = vadd.f32 0.0, %v364
    %366 = vmatmul.f32.gmra.mxu0 %v286
    %v367 = vpop.f32.mrf.mxu0
    %v368 = vadd.f32 0.0, %v367
    %369 = vmatmul.f32.gmra.mxu0 %v289
    %v370 = vpop.f32.mrf.mxu0
    %v371 = vadd.f32 0.0, %v370
    %372 = vmatmul.f32.gmra.mxu0 %v292
    %v373 = vpop.f32.mrf.mxu0
    %v374 = vadd.f32 0.0, %v373
    %375 = vmatmul.f32.gmra.mxu0 %v295
    %v376 = vpop.f32.mrf.mxu0
    %v377 = vadd.f32 0.0, %v376
    %378 = vmatmul.f32.gmra.mxu0 %v298
    %v379 = vpop.f32.mrf.mxu0
    %v380 = vadd.f32 0.0, %v379
    %381 = vmatmul.f32.gmra.mxu0 %v301
    %v382 = vpop.f32.mrf.mxu0
    %v383 = vadd.f32 0.0, %v382
    %384 = vdwg.mxu0
    %386 = vset.pattern.permute.xlu0 0
    %387 = vperm.xlu0 %386, %v66
    %v388 = vpop.permute.xlu0 %387
    %391 = vset.pattern.permute.xlu0 0
    %392 = vperm.xlu0 %391, %v67
    %v393 = vpop.permute.xlu0 %392
    %396 = vset.pattern.permute.xlu0 0
    %397 = vperm.xlu0 %396, %v68
    %v398 = vpop.permute.xlu0 %397
    %401 = vset.pattern.permute.xlu0 0
    %402 = vperm.xlu0 %401, %v69
    %v403 = vpop.permute.xlu0 %402
    %406 = vset.pattern.permute.xlu0 0
    %407 = vperm.xlu0 %406, %v70
    %v408 = vpop.permute.xlu0 %407
    %411 = vset.pattern.permute.xlu0 0
    %412 = vperm.xlu0 %411, %v71
    %v413 = vpop.permute.xlu0 %412
    %416 = vset.pattern.permute.xlu0 0
    %417 = vperm.xlu0 %416, %v72
    %v418 = vpop.permute.xlu0 %417
    %421 = vset.pattern.permute.xlu0 0
    %422 = vperm.xlu0 %421, %v73
    %v423 = vpop.permute.xlu0 %422
    %v425 = vsub.f32 %v321, %v388
    %v426 = vsub.f32 %v362, %v388
    %v427 = vsub.f32 %v324, %v393
    %v428 = vsub.f32 %v365, %v393
    %v429 = vsub.f32 %v327, %v398
    %v430 = vsub.f32 %v368, %v398
    %v431 = vsub.f32 %v330, %v403
    %v432 = vsub.f32 %v371, %v403
    %v433 = vsub.f32 %v333, %v408
    %v434 = vsub.f32 %v374, %v408
    %v435 = vsub.f32 %v336, %v413
    %v436 = vsub.f32 %v377, %v413
    %v437 = vsub.f32 %v339, %v418
    %v438 = vsub.f32 %v380, %v418
    %v439 = vsub.f32 %v342, %v423
    %v440 = vsub.f32 %v383, %v423
    %v441 = vld [vmem:[%s11] sm:$0x3]
    %v443 = vperm.slane %v441, 0
    %v444 = vperm.slane %v441, 1
    %v447 = vsub.f32 %v425, %v443
    %v448 = vsub.f32 %v426, %v444
    %v449 = vsub.f32 %v427, %v443
    %v450 = vsub.f32 %v428, %v444
    %v451 = vsub.f32 %v429, %v443
    %v452 = vsub.f32 %v430, %v444
    %v453 = vsub.f32 %v431, %v443
    %v454 = vsub.f32 %v432, %v444
    %v455 = vsub.f32 %v433, %v443
    %v456 = vsub.f32 %v434, %v444
    %v457 = vsub.f32 %v435, %v443
    %v458 = vsub.f32 %v436, %v444
    %v459 = vsub.f32 %v437, %v443
    %v460 = vsub.f32 %v438, %v444
    %v461 = vsub.f32 %v439, %v443
    %v462 = vsub.f32 %v440, %v444
    %v463 = vmin.f32 %v447, 0.0
    %v464 = vmin.f32 %v448, 0.0
    %v465 = vmin.f32 %v449, 0.0
    %v466 = vmin.f32 %v450, 0.0
    %v467 = vmin.f32 %v451, 0.0
    %v468 = vmin.f32 %v452, 0.0
    %v469 = vmin.f32 %v453, 0.0
    %v470 = vmin.f32 %v454, 0.0
    %v471 = vmin.f32 %v455, 0.0
    %v472 = vmin.f32 %v456, 0.0
    %v473 = vmin.f32 %v457, 0.0
    %v474 = vmin.f32 %v458, 0.0
    %v475 = vmin.f32 %v459, 0.0
    %v476 = vmin.f32 %v460, 0.0
    %v477 = vmin.f32 %v461, 0.0
    %v478 = vmin.f32 %v462, 0.0
    %v479 = vld [vmem:[%s5] sm:$0xff]
    %v480 = vld [vmem:[%s5 + $0x8] sm:$0xff]
    %481 = vmatpush.msra.mxu0 0.0
    %482 = vmatpush.msra.mxu0 0.0
    %483 = vmatpush.msra.mxu0 0.0
    %484 = vmatpush.msra.mxu0 0.0
    %485 = vmatpush.msra.mxu0 0.0
    %486 = vmatpush.msra.mxu0 0.0
    %487 = vmatpush.msra.mxu0 0.0
    %488 = vmatpush.msra.mxu0 0.0
    %489 = vmatpush.msra.mxu0 0.0
    %490 = vmatpush.msra.mxu0 0.0
    %491 = vmatpush.msra.mxu0 0.0
    %492 = vmatpush.msra.mxu0 0.0
    %493 = vmatpush.msra.mxu0 0.0
    %494 = vmatpush.msra.mxu0 0.0
    %495 = vmatpush.msra.mxu0 0.0
    %496 = vmatpush.msra.mxu0 %v479
    %497 = vmatmul.f32.gmra.mxu0 %v78
    %v498 = vpop.f32.mrf.mxu0
    %v499 = vadd.f32 0.0, %v498
    %500 = vmatmul.f32.gmra.mxu0 %v81
    %v501 = vpop.f32.mrf.mxu0
    %v502 = vadd.f32 0.0, %v501
    %503 = vmatmul.f32.gmra.mxu0 %v84
    %v504 = vpop.f32.mrf.mxu0
    %v505 = vadd.f32 0.0, %v504
    %506 = vmatmul.f32.gmra.mxu0 %v87
    %v507 = vpop.f32.mrf.mxu0
    %v508 = vadd.f32 0.0, %v507
    %509 = vmatmul.f32.gmra.mxu0 %v90
    %v510 = vpop.f32.mrf.mxu0
    %v511 = vadd.f32 0.0, %v510
    %512 = vmatmul.f32.gmra.mxu0 %v93
    %v513 = vpop.f32.mrf.mxu0
    %v514 = vadd.f32 0.0, %v513
    %515 = vmatmul.f32.gmra.mxu0 %v96
    %v516 = vpop.f32.mrf.mxu0
    %v517 = vadd.f32 0.0, %v516
    %518 = vmatmul.f32.gmra.mxu0 %v99
    %v519 = vpop.f32.mrf.mxu0
    %v520 = vadd.f32 0.0, %v519
    %521 = vdwg.mxu0
    %522 = vmatpush.msra.mxu0 0.0
    %523 = vmatpush.msra.mxu0 0.0
    %524 = vmatpush.msra.mxu0 0.0
    %525 = vmatpush.msra.mxu0 0.0
    %526 = vmatpush.msra.mxu0 0.0
    %527 = vmatpush.msra.mxu0 0.0
    %528 = vmatpush.msra.mxu0 0.0
    %529 = vmatpush.msra.mxu0 0.0
    %530 = vmatpush.msra.mxu0 0.0
    %531 = vmatpush.msra.mxu0 0.0
    %532 = vmatpush.msra.mxu0 0.0
    %533 = vmatpush.msra.mxu0 0.0
    %534 = vmatpush.msra.mxu0 0.0
    %535 = vmatpush.msra.mxu0 0.0
    %536 = vmatpush.msra.mxu0 0.0
    %537 = vmatpush.msra.mxu0 %v480
    %538 = vmatmul.f32.gmra.mxu0 %v78
    %v539 = vpop.f32.mrf.mxu0
    %v540 = vadd.f32 0.0, %v539
    %541 = vmatmul.f32.gmra.mxu0 %v81
    %v542 = vpop.f32.mrf.mxu0
    %v543 = vadd.f32 0.0, %v542
    %544 = vmatmul.f32.gmra.mxu0 %v84
    %v545 = vpop.f32.mrf.mxu0
    %v546 = vadd.f32 0.0, %v545
    %547 = vmatmul.f32.gmra.mxu0 %v87
    %v548 = vpop.f32.mrf.mxu0
    %v549 = vadd.f32 0.0, %v548
    %550 = vmatmul.f32.gmra.mxu0 %v90
    %v551 = vpop.f32.mrf.mxu0
    %v552 = vadd.f32 0.0, %v551
    %553 = vmatmul.f32.gmra.mxu0 %v93
    %v554 = vpop.f32.mrf.mxu0
    %v555 = vadd.f32 0.0, %v554
    %556 = vmatmul.f32.gmra.mxu0 %v96
    %v557 = vpop.f32.mrf.mxu0
    %v558 = vadd.f32 0.0, %v557
    %559 = vmatmul.f32.gmra.mxu0 %v99
    %v560 = vpop.f32.mrf.mxu0
    %v561 = vadd.f32 0.0, %v560
    %562 = vdwg.mxu0
    %v563 = vsub.f32 %v499, %v186
    %v564 = vsub.f32 %v540, %v186
    %v565 = vsub.f32 %v502, %v191
    %v566 = vsub.f32 %v543, %v191
    %v567 = vsub.f32 %v505, %v196
    %v568 = vsub.f32 %v546, %v196
    %v569 = vsub.f32 %v508, %v201
    %v570 = vsub.f32 %v549, %v201
    %v571 = vsub.f32 %v511, %v206
    %v572 = vsub.f32 %v552, %v206
    %v573 = vsub.f32 %v514, %v211
    %v574 = vsub.f32 %v555, %v211
    %v575 = vsub.f32 %v517, %v216
    %v576 = vsub.f32 %v558, %v216
    %v577 = vsub.f32 %v520, %v221
    %v578 = vsub.f32 %v561, %v221
    %v579 = vld [vmem:[%s9] sm:$0x3]
    %v581 = vperm.slane %v579, 0
    %v582 = vperm.slane %v579, 1
    %v585 = vsub.f32 %v563, %v581
    %v586 = vsub.f32 %v564, %v582
    %v587 = vsub.f32 %v565, %v581
    %v588 = vsub.f32 %v566, %v582
    %v589 = vsub.f32 %v567, %v581
    %v590 = vsub.f32 %v568, %v582
    %v591 = vsub.f32 %v569, %v581
    %v592 = vsub.f32 %v570, %v582
    %v593 = vsub.f32 %v571, %v581
    %v594 = vsub.f32 %v572, %v582
    %v595 = vsub.f32 %v573, %v581
    %v596 = vsub.f32 %v574, %v582
    %v597 = vsub.f32 %v575, %v581
    %v598 = vsub.f32 %v576, %v582
    %v599 = vsub.f32 %v577, %v581
    %v600 = vsub.f32 %v578, %v582
    %v601 = vmin.f32 %v585, 0.0
    %v602 = vmin.f32 %v586, 0.0
    %v603 = vmin.f32 %v587, 0.0
    %v604 = vmin.f32 %v588, 0.0
    %v605 = vmin.f32 %v589, 0.0
    %v606 = vmin.f32 %v590, 0.0
    %v607 = vmin.f32 %v591, 0.0
    %v608 = vmin.f32 %v592, 0.0
    %v609 = vmin.f32 %v593, 0.0
    %v610 = vmin.f32 %v594, 0.0
    %v611 = vmin.f32 %v595, 0.0
    %v612 = vmin.f32 %v596, 0.0
    %v613 = vmin.f32 %v597, 0.0
    %v614 = vmin.f32 %v598, 0.0
    %v615 = vmin.f32 %v599, 0.0
    %v616 = vmin.f32 %v600, 0.0
    %v617 = vld [vmem:[%s6] sm:$0xff]
    %v618 = vld [vmem:[%s6 + $0x8] sm:$0xff]
    %619 = vmatpush.msra.mxu0 0.0
    %620 = vmatpush.msra.mxu0 0.0
    %621 = vmatpush.msra.mxu0 0.0
    %622 = vmatpush.msra.mxu0 0.0
    %623 = vmatpush.msra.mxu0 0.0
    %624 = vmatpush.msra.mxu0 0.0
    %625 = vmatpush.msra.mxu0 0.0
    %626 = vmatpush.msra.mxu0 0.0
    %627 = vmatpush.msra.mxu0 0.0
    %628 = vmatpush.msra.mxu0 0.0
    %629 = vmatpush.msra.mxu0 0.0
    %630 = vmatpush.msra.mxu0 0.0
    %631 = vmatpush.msra.mxu0 0.0
    %632 = vmatpush.msra.mxu0 0.0
    %633 = vmatpush.msra.mxu0 0.0
    %634 = vmatpush.msra.mxu0 %v617
    %635 = vmatmul.f32.gmra.mxu0 %v280
    %v636 = vpop.f32.mrf.mxu0
    %v637 = vadd.f32 0.0, %v636
    %638 = vmatmul.f32.gmra.mxu0 %v283
    %v639 = vpop.f32.mrf.mxu0
    %v640 = vadd.f32 0.0, %v639
    %641 = vmatmul.f32.gmra.mxu0 %v286
    %v642 = vpop.f32.mrf.mxu0
    %v643 = vadd.f32 0.0, %v642
    %644 = vmatmul.f32.gmra.mxu0 %v289
    %v645 = vpop.f32.mrf.mxu0
    %v646 = vadd.f32 0.0, %v645
    %647 = vmatmul.f32.gmra.mxu0 %v292
    %v648 = vpop.f32.mrf.mxu0
    %v649 = vadd.f32 0.0, %v648
    %650 = vmatmul.f32.gmra.mxu0 %v295
    %v651 = vpop.f32.mrf.mxu0
    %v652 = vadd.f32 0.0, %v651
    %653 = vmatmul.f32.gmra.mxu0 %v298
    %v654 = vpop.f32.mrf.mxu0
    %v655 = vadd.f32 0.0, %v654
    %656 = vmatmul.f32.gmra.mxu0 %v301
    %v657 = vpop.f32.mrf.mxu0
    %v658 = vadd.f32 0.0, %v657
    %659 = vdwg.mxu0
    %660 = vmatpush.msra.mxu0 0.0
    %661 = vmatpush.msra.mxu0 0.0
    %662 = vmatpush.msra.mxu0 0.0
    %663 = vmatpush.msra.mxu0 0.0
    %664 = vmatpush.msra.mxu0 0.0
    %665 = vmatpush.msra.mxu0 0.0
    %666 = vmatpush.msra.mxu0 0.0
    %667 = vmatpush.msra.mxu0 0.0
    %668 = vmatpush.msra.mxu0 0.0
    %669 = vmatpush.msra.mxu0 0.0
    %670 = vmatpush.msra.mxu0 0.0
    %671 = vmatpush.msra.mxu0 0.0
    %672 = vmatpush.msra.mxu0 0.0
    %673 = vmatpush.msra.mxu0 0.0
    %674 = vmatpush.msra.mxu0 0.0
    %675 = vmatpush.msra.mxu0 %v618
    %676 = vmatmul.f32.gmra.mxu0 %v280
    %v677 = vpop.f32.mrf.mxu0
    %v678 = vadd.f32 0.0, %v677
    %679 = vmatmul.f32.gmra.mxu0 %v283
    %v680 = vpop.f32.mrf.mxu0
    %v681 = vadd.f32 0.0, %v680
    %682 = vmatmul.f32.gmra.mxu0 %v286
    %v683 = vpop.f32.mrf.mxu0
    %v684 = vadd.f32 0.0, %v683
    %685 = vmatmul.f32.gmra.mxu0 %v289
    %v686 = vpop.f32.mrf.mxu0
    %v687 = vadd.f32 0.0, %v686
    %688 = vmatmul.f32.gmra.mxu0 %v292
    %v689 = vpop.f32.mrf.mxu0
    %v690 = vadd.f32 0.0, %v689
    %691 = vmatmul.f32.gmra.mxu0 %v295
    %v692 = vpop.f32.mrf.mxu0
    %v693 = vadd.f32 0.0, %v692
    %694 = vmatmul.f32.gmra.mxu0 %v298
    %v695 = vpop.f32.mrf.mxu0
    %v696 = vadd.f32 0.0, %v695
    %697 = vmatmul.f32.gmra.mxu0 %v301
    %v698 = vpop.f32.mrf.mxu0
    %v699 = vadd.f32 0.0, %v698
    %700 = vdwg.mxu0
    %v701 = vsub.f32 %v637, %v388
    %v702 = vsub.f32 %v678, %v388
    %v703 = vsub.f32 %v640, %v393
    %v704 = vsub.f32 %v681, %v393
    %v705 = vsub.f32 %v643, %v398
    %v706 = vsub.f32 %v684, %v398
    %v707 = vsub.f32 %v646, %v403
    %v708 = vsub.f32 %v687, %v403
    %v709 = vsub.f32 %v649, %v408
    %v710 = vsub.f32 %v690, %v408
    %v711 = vsub.f32 %v652, %v413
    %v712 = vsub.f32 %v693, %v413
    %v713 = vsub.f32 %v655, %v418
    %v714 = vsub.f32 %v696, %v418
    %v715 = vsub.f32 %v658, %v423
    %v716 = vsub.f32 %v699, %v423
    %v717 = vld [vmem:[%s10] sm:$0x3]
    %v719 = vperm.slane %v717, 0
    %v720 = vperm.slane %v717, 1
    %v723 = vsub.f32 %v701, %v719
    %v724 = vsub.f32 %v702, %v720
    %v725 = vsub.f32 %v703, %v719
    %v726 = vsub.f32 %v704, %v720
    %v727 = vsub.f32 %v705, %v719
    %v728 = vsub.f32 %v706, %v720
    %v729 = vsub.f32 %v707, %v719
    %v730 = vsub.f32 %v708, %v720
    %v731 = vsub.f32 %v709, %v719
    %v732 = vsub.f32 %v710, %v720
    %v733 = vsub.f32 %v711, %v719
    %v734 = vsub.f32 %v712, %v720
    %v735 = vsub.f32 %v713, %v719
    %v736 = vsub.f32 %v714, %v720
    %v737 = vsub.f32 %v715, %v719
    %v738 = vsub.f32 %v716, %v720
    %v739 = vmin.f32 %v723, 0.0
    %v740 = vmin.f32 %v724, 0.0
    %v741 = vmin.f32 %v725, 0.0
    %v742 = vmin.f32 %v726, 0.0
    %v743 = vmin.f32 %v727, 0.0
    %v744 = vmin.f32 %v728, 0.0
    %v745 = vmin.f32 %v729, 0.0
    %v746 = vmin.f32 %v730, 0.0
    %v747 = vmin.f32 %v731, 0.0
    %v748 = vmin.f32 %v732, 0.0
    %v749 = vmin.f32 %v733, 0.0
    %v750 = vmin.f32 %v734, 0.0
    %v751 = vmin.f32 %v735, 0.0
    %v752 = vmin.f32 %v736, 0.0
    %v753 = vmin.f32 %v737, 0.0
    %v754 = vmin.f32 %v738, 0.0
    %v755 = vadd.f32 %v261, %v463
    %v756 = vadd.f32 %v262, %v464
    %v757 = vadd.f32 %v263, %v465
    %v758 = vadd.f32 %v264, %v466
    %v759 = vadd.f32 %v265, %v467
    %v760 = vadd.f32 %v266, %v468
    %v761 = vadd.f32 %v267, %v469
    %v762 = vadd.f32 %v268, %v470
    %v763 = vadd.f32 %v269, %v471
    %v764 = vadd.f32 %v270, %v472
    %v765 = vadd.f32 %v271, %v473
    %v766 = vadd.f32 %v272, %v474
    %v767 = vadd.f32 %v273, %v475
    %v768 = vadd.f32 %v274, %v476
    %v769 = vadd.f32 %v275, %v477
    %v770 = vadd.f32 %v276, %v478
    %v771 = vmul.f32 %v755, 1.442695
    %v772 = vpow.pop %v771
    %v773 = vmul.f32 %v756, 1.442695
    %v774 = vpow.pop %v773
    %v775 = vmul.f32 %v757, 1.442695
    %v776 = vpow.pop %v775
    %v777 = vmul.f32 %v758, 1.442695
    %v778 = vpow.pop %v777
    %v779 = vmul.f32 %v759, 1.442695
    %v780 = vpow.pop %v779
    %v781 = vmul.f32 %v760, 1.442695
    %v782 = vpow.pop %v781
    %v783 = vmul.f32 %v761, 1.442695
    %v784 = vpow.pop %v783
    %v785 = vmul.f32 %v762, 1.442695
    %v786 = vpow.pop %v785
    %v787 = vmul.f32 %v763, 1.442695
    %v788 = vpow.pop %v787
    %v789 = vmul.f32 %v764, 1.442695
    %v790 = vpow.pop %v789
    %v791 = vmul.f32 %v765, 1.442695
    %v792 = vpow.pop %v791
    %v793 = vmul.f32 %v766, 1.442695
    %v794 = vpow.pop %v793
    %v795 = vmul.f32 %v767, 1.442695
    %v796 = vpow.pop %v795
    %v797 = vmul.f32 %v768, 1.442695
    %v798 = vpow.pop %v797
    %v799 = vmul.f32 %v769, 1.442695
    %v800 = vpow.pop %v799
    %v801 = vmul.f32 %v770, 1.442695
    %v802 = vpow.pop %v801
    %v803 = vadd.f32 %v601, %v739
    %v804 = vadd.f32 %v602, %v740
    %v805 = vadd.f32 %v603, %v741
    %v806 = vadd.f32 %v604, %v742
    %v807 = vadd.f32 %v605, %v743
    %v808 = vadd.f32 %v606, %v744
    %v809 = vadd.f32 %v607, %v745
    %v810 = vadd.f32 %v608, %v746
    %v811 = vadd.f32 %v609, %v747
    %v812 = vadd.f32 %v610, %v748
    %v813 = vadd.f32 %v611, %v749
    %v814 = vadd.f32 %v612, %v750
    %v815 = vadd.f32 %v613, %v751
    %v816 = vadd.f32 %v614, %v752
    %v817 = vadd.f32 %v615, %v753
    %v818 = vadd.f32 %v616, %v754
    %v819 = vmul.f32 %v803, 1.442695
    %v820 = vpow.pop %v819
    %v821 = vmul.f32 %v804, 1.442695
    %v822 = vpow.pop %v821
    %v823 = vmul.f32 %v805, 1.442695
    %v824 = vpow.pop %v823
    %v825 = vmul.f32 %v806, 1.442695
    %v826 = vpow.pop %v825
    %v827 = vmul.f32 %v807, 1.442695
    %v828 = vpow.pop %v827
    %v829 = vmul.f32 %v808, 1.442695
    %v830 = vpow.pop %v829
    %v831 = vmul.f32 %v809, 1.442695
    %v832 = vpow.pop %v831
    %v833 = vmul.f32 %v810, 1.442695
    %v834 = vpow.pop %v833
    %v835 = vmul.f32 %v811, 1.442695
    %v836 = vpow.pop %v835
    %v837 = vmul.f32 %v812, 1.442695
    %v838 = vpow.pop %v837
    %v839 = vmul.f32 %v813, 1.442695
    %v840 = vpow.pop %v839
    %v841 = vmul.f32 %v814, 1.442695
    %v842 = vpow.pop %v841
    %v843 = vmul.f32 %v815, 1.442695
    %v844 = vpow.pop %v843
    %v845 = vmul.f32 %v816, 1.442695
    %v846 = vpow.pop %v845
    %v847 = vmul.f32 %v817, 1.442695
    %v848 = vpow.pop %v847
    %v849 = vmul.f32 %v818, 1.442695
    %v850 = vpow.pop %v849
    %v851 = vsub.f32 %v772, %v820
    %v852 = vsub.f32 %v774, %v822
    %v853 = vsub.f32 %v776, %v824
    %v854 = vsub.f32 %v778, %v826
    %v855 = vsub.f32 %v780, %v828
    %v856 = vsub.f32 %v782, %v830
    %v857 = vsub.f32 %v784, %v832
    %v858 = vsub.f32 %v786, %v834
    %v859 = vsub.f32 %v788, %v836
    %v860 = vsub.f32 %v790, %v838
    %v861 = vsub.f32 %v792, %v840
    %v862 = vsub.f32 %v794, %v842
    %v863 = vsub.f32 %v796, %v844
    %v864 = vsub.f32 %v798, %v846
    %v865 = vsub.f32 %v800, %v848
    %v866 = vsub.f32 %v802, %v850
    %867 = vst [vmem:[#allocation2] sm:$0xff] %v851
    %868 = vst [vmem:[#allocation2 + $0x8] sm:$0xff] %v852
    %869 = vst [vmem:[#allocation2 + $0x10] sm:$0xff] %v853
    %870 = vst [vmem:[#allocation2 + $0x18] sm:$0xff] %v854
    %871 = vst [vmem:[#allocation2 + $0x20] sm:$0xff] %v855
    %872 = vst [vmem:[#allocation2 + $0x28] sm:$0xff] %v856
    %873 = vst [vmem:[#allocation2 + $0x30] sm:$0xff] %v857
    %874 = vst [vmem:[#allocation2 + $0x38] sm:$0xff] %v858
    %875 = vst [vmem:[#allocation2 + $0x40] sm:$0xff] %v859
    %876 = vst [vmem:[#allocation2 + $0x48] sm:$0xff] %v860
    %877 = vst [vmem:[#allocation2 + $0x50] sm:$0xff] %v861
    %878 = vst [vmem:[#allocation2 + $0x58] sm:$0xff] %v862
    %879 = vst [vmem:[#allocation2 + $0x60] sm:$0xff] %v863
    %880 = vst [vmem:[#allocation2 + $0x68] sm:$0xff] %v864
    %881 = vst [vmem:[#allocation2 + $0x70] sm:$0xff] %v865
    %882 = vst [vmem:[#allocation2 + $0x78] sm:$0xff] %v866
    // Predicated region
    $region50: #{tpu_custom_call.1} parent=1 // pred_check
      _
    $region51: #{tpu_custom_call.1} parent=1 // pred_check_branch
      %884 = sbr.rel (0) target = $region53
    $region52: #{tpu_custom_call.1} parent=1 // pred_region
      %886 = vsyncadd [#allocation3], 0
      %s887 = sshll.u32 [#allocation2], 4
      %s888 = int_to_ptr.vmem [resolvable:$true] %s887
      %s889 = sshll.u32 %s12, 4
      %s890 = int_to_ptr.hbm [resolvable:$true] %s889
      %895 = dma.vmem_to_hbm [thread:$0]  %s888, 2048, %s890, [#allocation3], 256, 256, 16
    $region53: #{tpu_custom_call.1} parent=1 // pred_fallthru
      _
    // Predicated region
    $region54: #{tpu_custom_call.1} parent=1 // pred_check
      _
    $region55: #{tpu_custom_call.1} parent=1 // pred_check_branch
      %897 = sbr.rel (0) target = $region57
    $region56: #{tpu_custom_call.1} parent=1 // pred_region
      %899 = dma.done [#allocation3], 2048
    $region57: #{tpu_custom_call.1} parent=1 // pred_fallthru
      _
    %900 = vsyncpa [#allocation3], 1

</llo_original>
